<compile_context>
chip_gen: v6e
topology: v6e:2x2x1
jax: 0.10.0
libtpu: 0.0.40
codegen_flags: <defaults>
</compile_context>

<pallas_src>
import jax
import jax.numpy as jnp
from jax.experimental import pallas as pl
from jax.experimental.pallas import tpu as pltpu


def _round_up(x: int, m: int) -> int:
    return ((x + m - 1) // m) * m


def _choose_tile_b(batch: int, n_classes: int, in_itemsize: int) -> int:
    # Per-grid-step VMEM estimate: double-buffered pred tile + f32 working set
    # (z / exp / logp / in-register true_dist) + tiny target/output tiles.
    budget_bytes = 8 * 1024 * 1024
    per_row_bytes = 2 * n_classes * in_itemsize + 4 * n_classes * 4 + 32
    tb = budget_bytes // max(per_row_bytes, 1)
    tb = max(8, min(1024, tb))
    # sublane granularity: 8 rows for 32-bit input, 16 for packed (bf16/int8).
    gran = 8 if in_itemsize >= 4 else 16
    tb = max(gran, (tb // gran) * gran)
    # don't tile past the (sublane-rounded) batch.
    tb = min(tb, max(gran, _round_up(batch, gran)))
    return tb


def make_label_smoothing_loss(cls_target: int, cls: int, smoothing: float = 0.0,
                              tile_b: int | None = None):
    confidence = float(1.0 - smoothing)
    n_smooth = cls - 10
    smooth_val = float(smoothing / n_smooth)
    num_classes = cls_target + n_smooth

    def kernel(pred_ref, target_ref, row_loss_ref):
        # pred_ref: (TILE_B, C) native dtype; target_ref: (TILE_B, 1) int32.
        pred = pred_ref[...].astype(jnp.float32)   # upcast after the (cheaper) load
        tgt = target_ref[...]
        tb, c = pred.shape

        # log_softmax along the class (lane) axis.
        m = jnp.max(pred, axis=-1, keepdims=True)
        z = pred - m
        lse = jnp.log(jnp.sum(jnp.exp(z), axis=-1, keepdims=True))
        logp = z - lse

        # Smoothed label distribution built in-register (never stored to HBM):
        #   0 for col < cls_target, smoothing/(cls-10) otherwise,
        #   target column overwritten with `confidence` (torch scatter_ overwrite).
        col = jax.lax.broadcasted_iota(jnp.int32, (tb, c), 1)
        base = jnp.where(col >= cls_target,
                         jnp.float32(smooth_val), jnp.float32(0.0))
        true_dist = jnp.where(col == tgt, jnp.float32(confidence), base)

        # Per-row loss; negation folded into the small (TILE_B, 1) store.
        row_loss_ref[...] = -jnp.sum(true_dist * logp, axis=-1, keepdims=True)

    def forward(pred, target):
        b, c = pred.shape
        assert c == num_classes, (
            f"pred class dim {c} != cls_target + (cls - 10) = {num_classes}")

        in_itemsize = jnp.dtype(pred.dtype).itemsize
        gran = 8 if in_itemsize >= 4 else 16
        if tile_b is not None:
            tb = max(gran, (int(tile_b) // gran) * gran)
        else:
            tb = _choose_tile_b(b, c, in_itemsize)
        b_pad = _round_up(b, tb)

        target2d = target.reshape(b, 1).astype(jnp.int32)
        if b_pad != b:
            pred_in = jnp.pad(pred, ((0, b_pad - b), (0, 0)))
            tgt_in = jnp.pad(target2d, ((0, b_pad - b), (0, 0)))
        else:
            pred_in, tgt_in = pred, target2d

        row_loss = pl.pallas_call(
            kernel,
            out_shape=jax.ShapeDtypeStruct((b_pad, 1), jnp.float32),
            grid=(b_pad // tb,),
            in_specs=[
                pl.BlockSpec((tb, c), lambda i: (i, 0)),   # pred tile (native dtype)
                pl.BlockSpec((tb, 1), lambda i: (i, 0)),   # target tile
            ],
            out_specs=pl.BlockSpec((tb, 1), lambda i: (i, 0)),
            compiler_params=pltpu.CompilerParams(
                dimension_semantics=("parallel",),
                vmem_limit_bytes=32 * 1024 * 1024,
            ),
        )(pred_in, tgt_in)

        # Mean over the true batch size (padded rows sliced off, no masking needed).
        loss = jnp.sum(row_loss[:b, 0]) / jnp.float32(b)

        # true_dist for the module's second return value: constant row pattern
        # plus one overwritten column per row (no need to burn HBM writes in
        # the kernel for this).
        col = jnp.arange(num_classes, dtype=jnp.int32)[None, :]
        base = jnp.where(col >= cls_target,
                         jnp.float32(smooth_val), jnp.float32(0.0))
        true_dist = jnp.where(col == target2d, jnp.float32(confidence),
                              jnp.broadcast_to(base, (b, num_classes)))
        return loss, true_dist

    return forward


def _reference(pred, target, cls_target, cls, smoothing):
    """Pure-JAX reference mirroring the PyTorch forward."""
    confidence = 1.0 - smoothing
    b, c = pred.shape
    logp = jax.nn.log_softmax(pred.astype(jnp.float32), axis=-1)
    true_dist = jnp.concatenate(
        [jnp.zeros((b, cls_target), jnp.float32),
         jnp.full((b, cls - 10), smoothing / (cls - 10), jnp.float32)],
        axis=1,
    )
    true_dist = true_dist.at[jnp.arange(b), target].set(confidence)
    loss = jnp.mean(jnp.sum(-true_dist * logp, axis=-1))
    return loss, true_dist


if __name__ == "__main__":
    # Shapes consistent with the module: cls_target=16, cls=26 -> C = 16 + 16 = 32
    cls_target = 16
    cls = 26
    smoothing = 0.1
    C = cls_target + (cls - 10)

    key = jax.random.PRNGKey(0)
    kp, kt, kp2, kt2 = jax.random.split(key, 4)

    # --- small demo shape (single tile) ---
    B = 8
    pred = jax.random.normal(kp, (B, C), dtype=jnp.float32)
    target = jax.random.randint(kt, (B,), 0, C, dtype=jnp.int32)

    loss_fn = make_label_smoothing_loss(cls_target, cls, smoothing)
    loss, true_dist = loss_fn(pred, target)
    jax.block_until_ready((loss, true_dist))

    ref_loss, ref_td = _reference(pred, target, cls_target, cls, smoothing)
    assert jnp.allclose(loss, ref_loss, atol=1e-5, rtol=1e-5), (loss, ref_loss)
    assert jnp.allclose(true_dist, ref_td, atol=1e-6), "true_dist mismatch"

    # --- exercise the batch grid + ragged padding path (3 tiles of 128) ---
    B2 = 300
    pred2 = jax.random.normal(kp2, (B2, C), dtype=jnp.float32)
    target2 = jax.random.randint(kt2, (B2,), 0, C, dtype=jnp.int32)

    loss_fn2 = make_label_smoothing_loss(cls_target, cls, smoothing, tile_b=128)
    loss2, true_dist2 = loss_fn2(pred2, target2)
    jax.block_until_ready((loss2, true_dist2))

    ref_loss2, ref_td2 = _reference(pred2, target2, cls_target, cls, smoothing)
    assert jnp.allclose(loss2, ref_loss2, atol=1e-5, rtol=1e-5), (loss2, ref_loss2)
    assert jnp.allclose(true_dist2, ref_td2, atol=1e-6), "true_dist mismatch (tiled)"

    print("KERNEL_OK")
</pallas_src>

<mosaic_0001>
module attributes {stable_mosaic.version = 11 : i64} {
  func.func @kernel(%arg0: i32, %arg1: memref<8x32xf32, #tpu.memory_space<vmem>>, %arg2: memref<8x1xi32, #tpu.memory_space<vmem>>, %arg3: memref<8x1xf32, #tpu.memory_space<vmem>>) attributes {dimension_semantics = [#tpu.dimension_semantics<parallel>], iteration_bounds = array<i64: 1>, scalar_prefetch = 0 : i64, scratch_operands = 0 : i64, tpu.core_type = #tpu.core_type<tc>, window_params = [{transform_indices = @transform_0, window_bounds = array<i64: 8, 32>}, {transform_indices = @transform_1, window_bounds = array<i64: 8, 1>}, {transform_indices = @transform_2, window_bounds = array<i64: 8, 1>}]} {
    %c0 = arith.constant 0 : index
    %c0_0 = arith.constant 0 : index
    %0 = vector.load %arg1[%c0, %c0_0] : memref<8x32xf32, #tpu.memory_space<vmem>>, vector<8x32xf32>
    %c0_1 = arith.constant 0 : index
    %c0_2 = arith.constant 0 : index
    %1 = vector.load %arg2[%c0_1, %c0_2] : memref<8x1xi32, #tpu.memory_space<vmem>>, vector<8x1xi32>
    %cst = arith.constant dense<0xFF800000> : vector<8xf32>
    %2 = vector.multi_reduction <maximumf>, %0, %cst [1] : vector<8x32xf32> to vector<8xf32>
    %3 = vector.shape_cast %2 : vector<8xf32> to vector<8x1xf32>
    %4 = vector.broadcast %3 : vector<8x1xf32> to vector<8x32xf32>
    %5 = arith.subf %0, %4 : vector<8x32xf32>
    %6 = math.exp %5 : vector<8x32xf32>
    %cst_3 = arith.constant dense<0.000000e+00> : vector<8xf32>
    %7 = vector.multi_reduction <add>, %6, %cst_3 [1] : vector<8x32xf32> to vector<8xf32>
    %8 = vector.shape_cast %7 : vector<8xf32> to vector<8x1xf32>
    %9 = math.log %8 : vector<8x1xf32>
    %10 = vector.broadcast %9 : vector<8x1xf32> to vector<8x32xf32>
    %11 = arith.subf %5, %10 : vector<8x32xf32>
    %12 = tpu.iota {dimensions = array<i32: 1>} : vector<8x32xi32>
    %c16_i32 = arith.constant 16 : i32
    %13 = vector.broadcast %c16_i32 : i32 to vector<8x32xi32>
    %14 = arith.cmpi sge, %12, %13 : vector<8x32xi32>
    %cst_4 = arith.constant 6.250000e-03 : f32
    %cst_5 = arith.constant 0.000000e+00 : f32
    %15 = vector.broadcast %cst_4 : f32 to vector<8x32xf32>
    %16 = vector.broadcast %cst_5 : f32 to vector<8x32xf32>
    %17 = arith.select %14, %15, %16 : vector<8x32xi1>, vector<8x32xf32>
    %18 = vector.broadcast %1 : vector<8x1xi32> to vector<8x32xi32>
    %19 = arith.cmpi eq, %12, %18 : vector<8x32xi32>
    %cst_6 = arith.constant 0.899999976 : f32
    %20 = vector.broadcast %cst_6 : f32 to vector<8x32xf32>
    %21 = arith.select %19, %20, %17 : vector<8x32xi1>, vector<8x32xf32>
    %22 = arith.mulf %21, %11 : vector<8x32xf32>
    %cst_7 = arith.constant dense<0.000000e+00> : vector<8xf32>
    %23 = vector.multi_reduction <add>, %22, %cst_7 [1] : vector<8x32xf32> to vector<8xf32>
    %24 = vector.shape_cast %23 : vector<8xf32> to vector<8x1xf32>
    %cst_8 = arith.constant 0.000000e+00 : f32
    %25 = vector.broadcast %cst_8 : f32 to vector<8x1xf32>
    %26 = arith.subf %25, %24 : vector<8x1xf32>
    %c0_9 = arith.constant 0 : index
    %c0_10 = arith.constant 0 : index
    %27 = vector.load %arg3[%c0_9, %c0_10] : memref<8x1xf32, #tpu.memory_space<vmem>>, vector<8x1xf32>
    tpu.vector_store %arg3[%c0_9, %c0_10], %26 {strides = array<i32>} : memref<8x1xf32, #tpu.memory_space<vmem>>, vector<8x1xf32>,
    return
  }
  func.func @transform_0(%arg0: i32) -> (i32, i32) {
    %c0_i32 = arith.constant 0 : i32
    %c0_i32_0 = arith.constant 0 : i32
    return %arg0, %c0_i32 : i32, i32
  }
  func.func @transform_1(%arg0: i32) -> (i32, i32) {
    %c0_i32 = arith.constant 0 : i32
    %c0_i32_0 = arith.constant 0 : i32
    return %arg0, %c0_i32 : i32, i32
  }
  func.func @transform_2(%arg0: i32) -> (i32, i32) {
    %c0_i32 = arith.constant 0 : i32
    %c0_i32_0 = arith.constant 0 : i32
    return %arg0, %c0_i32 : i32, i32
  }
}

</mosaic_0001>

<llo_original>
// kernel: tpu_custom_call.1
$region0: #{tpu_custom_call.1}
  #allocation0 [shape = 'u32[]', space=smem, size = 0x4, offset = 0x4, fixed_abs, tag = 'smem constant byte address 0x4 - core index']
  #allocation1 [shape = 'u32[144,128]{1,0:T(1,128)}', space=vmem, size = 0x12000, scoped, tag = 'internal scratch']
  %s0 = inlined_call_operand.vmem [shape: f32[8,32], index: 0, kind: input, shape index: {}]
  %s1 = inlined_call_operand.vmem [shape: s32[8,1], index: 1, kind: input, shape index: {}]
  %s2 = inlined_call_operand.vmem [shape: f32[8,1], index: 2, kind: output, shape index: {}]
  %s3 = sld [smem:[#allocation0]]
  $region18: #{tpu_custom_call.1} parent=0
    _
  %s5 = ssub.s32 1, %s3
  %s6 = scalar_select 0, %s5, %s3
  // Predicated region
  $region2: #{tpu_custom_call.1} parent=0 // pred_check
    _
  $region3: #{tpu_custom_call.1} parent=0 // pred_check_branch
    %8 = sbr.rel (0) target = $region5
  $region4: #{tpu_custom_call.1} parent=0 // pred_region
    _
  $region5: #{tpu_custom_call.1} parent=0 // pred_fallthru
    _
  // Predicated region
  $region6: #{tpu_custom_call.1} parent=0 // pred_check
    _
  $region7: #{tpu_custom_call.1} parent=0 // pred_check_branch
    %10 = sbr.rel (0) target = $region9
  $region8: #{tpu_custom_call.1} parent=0 // pred_region
    _
  $region9: #{tpu_custom_call.1} parent=0 // pred_fallthru
    _
  %v11 = vld [vmem:[%s0] sm:$0xff]
  %v12 = vld [vmem:[%s1] sm:$0xff]
  %vm13 = vcmask 261120
  %v14 = vsel %vm13, %v11, -inf
  %15 = vmax.xlane.f32.xlu0 %v14
  %v16 = vpop.xlane.xlu0 %15
  %v17 = vsub.f32 %v11, %v16
  %v18 = vmul.f32 %v17, 1.442695
  %v19 = vpow.pop %v18
  %v20 = vsel %vm13, %v19, 0.0
  %21 = vadd.xlane.f32.xlu0 %v20
  %v22 = vpop.xlane.xlu0 %21
  %v23 = vlog2.pop %v22
  %v24 = vmul.f32 %v23, 0.6931472
  %v25 = vsub.f32 %v17, %v24
  %v26 = vlaneseq
  %v27 = vand.u32 %v26, 127
  %vm28 = vcmp.ge.s32.totalorder %v27, 16
  %v29 = vsel %vm28, 0.00625, 0.0
  %30 = vset.pattern.permute.xlu0 0
  %31 = vperm.xlu0 %30, %v12
  %v32 = vpop.permute.xlu0 %31
  %vm33 = vcmp.eq.s32.totalorder %v27, %v32
  %v34 = vsel %vm33, 0.9, %v29
  %v35 = vmul.f32 %v34, %v25
  %v36 = vsel %vm13, %v35, 0.0
  %37 = vadd.xlane.f32.xlu0 %v36
  %v38 = vpop.xlane.xlu0 %37
  %v39 = vsub.f32 0.0, %v38
  %vm40 = vcmask 7168
  %41 = vst.msk [vmem:[%s2] sm:$0xff] %vm40, %v39
  // Predicated region
  $region10: #{tpu_custom_call.1} parent=0 // pred_check
    _
  $region11: #{tpu_custom_call.1} parent=0 // pred_check_branch
    %43 = sbr.rel (0) target = $region13
  $region12: #{tpu_custom_call.1} parent=0 // pred_region
    _
  $region13: #{tpu_custom_call.1} parent=0 // pred_fallthru
    _
  // Predicated region
  $region14: #{tpu_custom_call.1} parent=0 // pred_check
    _
  $region15: #{tpu_custom_call.1} parent=0 // pred_check_branch
    %45 = sbr.rel (0) target = $region17
  $region16: #{tpu_custom_call.1} parent=0 // pred_region
    _
  $region17: #{tpu_custom_call.1} parent=0 // pred_fallthru
    _

</llo_original>
